<compile_context>
chip_gen: v7x
topology: tpu7x:2x2x1
jax: 0.10.0
libtpu: 0.0.40
codegen_flags: <defaults>
</compile_context>

<pallas_src>
import jax
import jax.numpy as jnp
from jax import lax
from jax.experimental import pallas as pl
from jax.experimental.pallas import tpu as pltpu

# ----------------------------------------------------------------------------
# cfg.TRAIN constants (py-faster-rcnn defaults, small BATCH_SIZE for the demo)
# ----------------------------------------------------------------------------
CFG = dict(
    BATCH_SIZE=16,
    FG_FRACTION=0.25,
    FG_THRESH=0.5,
    BG_THRESH_HI=0.5,
    BG_THRESH_LO=0.0,
    BBOX_NORMALIZE_MEANS=(0.0, 0.0, 0.0, 0.0),
    BBOX_NORMALIZE_STDS=(0.1, 0.1, 0.2, 0.2),
    BBOX_INSIDE_WEIGHTS=(1.0, 1.0, 1.0, 1.0),
)


def _round_up(x, m):
    return ((x + m - 1) // m) * m


# ----------------------------------------------------------------------------
# Kernel A: IoU + argmax matching + normalized bbox_transform (lane-dense)
# ----------------------------------------------------------------------------
def _match_kernel(p_ref, gtc_ref, gtr_ref, out_ref):
    # p_ref  : [4,  BP]  proposal boxes transposed (rows: x1, y1, x2, y2)
    # gtc_ref: [Gp, 8 ]  gt boxes, one per sublane (cols: x1,y1,x2,y2,cls,pid,0,0)
    # gtr_ref: [8,  Gp]  same data transposed (for the MXU attribute gather)
    # out_ref: [8,  BP]  rows: max_ov, cls, pid, dx, dy, dw, dh, 0
    px1 = p_ref[0:1, :]
    py1 = p_ref[1:2, :]
    px2 = p_ref[2:3, :]
    py2 = p_ref[3:4, :]

    gx1 = gtc_ref[:, 0:1]
    gy1 = gtc_ref[:, 1:2]
    gx2 = gtc_ref[:, 2:3]
    gy2 = gtc_ref[:, 3:4]

    # bbox_overlaps (py-faster-rcnn "+1" pixel convention), IoU matrix [Gp, BP]
    area_p = (px2 - px1 + 1.0) * (py2 - py1 + 1.0)                   # [1,  BP]
    area_g = (gx2 - gx1 + 1.0) * (gy2 - gy1 + 1.0)                   # [Gp, 1 ]
    iw = jnp.maximum(jnp.minimum(px2, gx2) - jnp.maximum(px1, gx1) + 1.0, 0.0)
    ih = jnp.maximum(jnp.minimum(py2, gy2) - jnp.maximum(py1, gy1) + 1.0, 0.0)
    inter = iw * ih                                                   # [Gp, BP]
    union = jnp.maximum(area_p + area_g - inter, 1e-8)                # degenerate-box guard
    iou = inter * pl.reciprocal(union, approx=False)                  # divide on EUP slot

    # max / (first) argmax over the gt (sublane) axis
    max_ov = jnp.max(iou, axis=0, keepdims=True)                      # [1, BP]
    gp = iou.shape[0]
    row = lax.broadcasted_iota(jnp.int32, iou.shape, 0)
    cand = jnp.where(iou >= max_ov, row, jnp.int32(gp))
    amin = jnp.min(cand, axis=0, keepdims=True)                       # [1, BP]
    onehot = (row == amin).astype(jnp.float32)                        # [Gp, BP]

    # gather ALL matched gt attributes with one MXU contraction: [8,Gp]@[Gp,BP]
    matched = jnp.dot(gtr_ref[...], onehot,
                      preferred_element_type=jnp.float32)             # [8, BP]
    mgx1 = matched[0:1, :]
    mgy1 = matched[1:2, :]
    mgx2 = matched[2:3, :]
    mgy2 = matched[3:4, :]
    cls = matched[4:5, :]
    pid = matched[5:6, :]

    # bbox_transform + target normalization (means/stds folded at trace time)
    ew = px2 - px1 + 1.0
    eh = py2 - py1 + 1.0
    inv_ew = pl.reciprocal(ew, approx=False)
    inv_eh = pl.reciprocal(eh, approx=False)
    ecx = px1 + 0.5 * ew
    ecy = py1 + 0.5 * eh
    gw = mgx2 - mgx1 + 1.0
    gh = mgy2 - mgy1 + 1.0
    gcx = mgx1 + 0.5 * gw
    gcy = mgy1 + 0.5 * gh

    m = CFG["BBOX_NORMALIZE_MEANS"]
    inv_s = tuple(1.0 / s for s in CFG["BBOX_NORMALIZE_STDS"])
    ndx = ((gcx - ecx) * inv_ew - m[0]) * inv_s[0]
    ndy = ((gcy - ecy) * inv_eh - m[1]) * inv_s[1]
    ndw = (jnp.log(gw * inv_ew) - m[2]) * inv_s[2]
    ndh = (jnp.log(gh * inv_eh) - m[3]) * inv_s[3]

    # single lane-dense store of the fused output slab
    out_ref[...] = jnp.concatenate(
        [max_ov, cls, pid, ndx, ndy, ndw, ndh, jnp.zeros_like(max_ov)], axis=0)


def _match_and_transform(p_t, gt_cols, gt_rows, *, block_p=1024):
    """p_t: [4, P] f32, gt_cols: [Gp, 8] f32, gt_rows: [8, Gp] f32 -> slab [8, P]."""
    P = p_t.shape[1]
    Gp = gt_rows.shape[1]
    bp = min(block_p, _round_up(P, 128))
    p_pad = _round_up(P, bp)
    if p_pad != P:
        # zero-padded proposal columns are harmless (sliced off below)
        p_t = jnp.pad(p_t, ((0, 0), (0, p_pad - P)))

    cost = pl.CostEstimate(
        flops=int(16 * Gp * p_pad + 2 * 8 * Gp * p_pad + 48 * p_pad),
        transcendentals=int(5 * p_pad),
        bytes_accessed=int(4 * (4 * p_pad + 2 * 8 * Gp + 8 * p_pad)),
    )

    slab = pl.pallas_call(
        _match_kernel,
        out_shape=jax.ShapeDtypeStruct((8, p_pad), jnp.float32),
        grid_spec=pltpu.PrefetchScalarGridSpec(
            num_scalar_prefetch=0,
            grid=(p_pad // bp,),
            in_specs=[
                pl.BlockSpec((4, bp), lambda i: (0, i)),    # proposals (lane-dense)
                pl.BlockSpec((Gp, 8), lambda i: (0, 0)),    # gt as columns
                pl.BlockSpec((8, Gp), lambda i: (0, 0)),    # gt as rows (MXU)
            ],
            out_specs=pl.BlockSpec((8, bp), lambda i: (0, i)),
        ),
        compiler_params=pltpu.CompilerParams(
            dimension_semantics=("parallel",)),              # engages 2nd TC on v7x
        cost_estimate=cost,
    )(p_t, gt_cols, gt_rows)
    return slab[:, :P]


# ----------------------------------------------------------------------------
# Class-specific scatter of deltas / inside / outside weights (plain jnp).
# Work is BATCH_SIZE x 4*num_classes (~1.5 KB); a dedicated pallas_call would
# be pure launch overhead, so XLA fuses this with the surrounding gathers.
# ----------------------------------------------------------------------------
def _regression_targets(deltas_k, cls_i32, num_classes):
    c4 = 4 * num_classes
    col = jnp.arange(c4, dtype=jnp.int32)[None, :]                    # [1, 4C]
    cls = cls_i32[:, None]                                            # [N, 1]
    sel = jnp.logical_and((col // 4) == cls, cls > 0)                 # [N, 4C]
    d_full = jnp.tile(deltas_k, (1, num_classes))                     # [N, 4C]
    iw_full = jnp.tile(
        jnp.asarray(CFG["BBOX_INSIDE_WEIGHTS"], jnp.float32)[None, :],
        (1, num_classes))                                             # [1, 4C]
    deltas = jnp.where(sel, d_full, 0.0)
    inside_w = jnp.where(sel, iw_full, 0.0)
    outside_w = jnp.where(sel, 1.0, 0.0)
    return deltas, inside_w, outside_w


# ----------------------------------------------------------------------------
# Module wrapper
# ----------------------------------------------------------------------------
class ProposalTargetLayerPallas:
    def __init__(self, num_classes, bg_pid_label=-2):
        self.num_classes = num_classes
        self.bg_pid_label = bg_pid_label

    def __call__(self, proposals, gt_boxes):
        """proposals: [Np, 5] (0, x1, y1, x2, y2); gt_boxes: [G, 6]."""
        G = gt_boxes.shape[0]
        zeros = jnp.zeros((G, 1), gt_boxes.dtype)
        proposals_all = jnp.concatenate(
            [proposals, jnp.concatenate([zeros, gt_boxes[:, :4]], axis=1)], axis=0)
        P = proposals_all.shape[0]

        # lane-dense proposal layout: [4, P]
        p_t = proposals_all[:, 1:5].T.astype(jnp.float32)

        # gt boxes padded to a sublane multiple; pad boxes are placed far away
        # so their IoU is exactly 0 and (with first-argmax tie-breaking) they
        # can never be selected -> semantics identical to the unpadded match.
        Gp = _round_up(max(G, 1), 8)
        gt_cols = jnp.zeros((Gp, 8), jnp.float32)
        gt_cols = gt_cols.at[G:, :4].set(-1e8)
        gt_cols = gt_cols.at[:G, :6].set(gt_boxes.astype(jnp.float32))   # [Gp, 8]
        gt_rows = gt_cols.T                                              # [8, Gp]

        slab = _match_and_transform(p_t, gt_cols, gt_rows)               # [8, P]
        max_ov = slab[0]
        cls_all = slab[1]
        pid_all = slab[2]
        deltas_all = slab[3:7].T                                         # [P, 4]

        batch_size = CFG["BATCH_SIZE"]
        num_fg_target = int(round(CFG["FG_FRACTION"] * batch_size))

        fg_mask = max_ov >= CFG["FG_THRESH"]
        bg_mask = jnp.logical_and(max_ov < CFG["BG_THRESH_HI"],
                                  max_ov >= CFG["BG_THRESH_LO"])

        # TODO(synk): torch.nonzero + torch_rand_choice produce dynamic-size,
        # randomly subsampled fg/bg index sets; JAX requires static shapes, so
        # we deterministically take the first available fg/bg indices and always
        # emit exactly BATCH_SIZE rows (extra slots are labeled as background).
        idx = jnp.arange(P, dtype=jnp.int32)
        fg_order = jnp.argsort(jnp.where(fg_mask, idx, idx + P))
        bg_order = jnp.argsort(jnp.where(bg_mask, idx, idx + P))
        n_fg = jnp.minimum(jnp.int32(num_fg_target),
                           jnp.sum(fg_mask.astype(jnp.int32)))

        pos = jnp.arange(batch_size, dtype=jnp.int32)
        is_fg_slot = pos < n_fg
        fg_pick = fg_order[jnp.clip(pos, 0, P - 1)]
        bg_pick = bg_order[jnp.clip(pos - n_fg, 0, P - 1)]
        keep = jnp.where(is_fg_slot, fg_pick, bg_pick)

        proposals_k = proposals_all[keep]                                 # [N, 5]
        cls_k = jnp.where(is_fg_slot, cls_all[keep], 0.0)                 # bg -> 0
        pid_k = jnp.where(is_fg_slot, pid_all[keep], float(self.bg_pid_label))
        deltas_k = deltas_all[keep]                                       # [N, 4]

        cls_i32 = jnp.rint(cls_k).astype(jnp.int32)
        pid_i32 = jnp.rint(pid_k).astype(jnp.int32)

        deltas, inside_w, outside_w = _regression_targets(
            deltas_k, cls_i32, self.num_classes)

        return proposals_k, cls_i32, pid_i32, deltas, inside_w, outside_w


# ----------------------------------------------------------------------------
# Demo
# ----------------------------------------------------------------------------
if __name__ == "__main__":
    key = jax.random.PRNGKey(0)
    k1, k2, k3, k4 = jax.random.split(key, 4)

    num_classes = 2           # background + person
    G = 4                     # ground-truth boxes
    Np = 24                   # RPN proposals

    gt_boxes = jnp.array(
        [[10., 10., 30., 40., 1., 0.],
         [35.,  5., 55., 30., 1., 1.],
         [ 5., 35., 25., 60., 1., -1.],
         [40., 40., 60., 62., 1., 2.]], dtype=jnp.float32)

    # 12 proposals jittered around the gt boxes (likely foreground)
    base = jnp.tile(gt_boxes[:, :4], (3, 1))                       # [12, 4]
    near = base + jax.random.uniform(k1, (12, 4), minval=-3.0, maxval=3.0)
    # 12 random boxes (likely background)
    xy1 = jax.random.uniform(k2, (12, 2), minval=0.0, maxval=40.0)
    wh = jax.random.uniform(k3, (12, 2), minval=4.0, maxval=20.0)
    rand_boxes = jnp.concatenate([xy1, xy1 + wh], axis=1)
    boxes = jnp.concatenate([near, rand_boxes], axis=0).astype(jnp.float32)
    proposals = jnp.concatenate([jnp.zeros((Np, 1), jnp.float32), boxes], axis=1)

    # single-batch assertion from the reference module (host-side check)
    assert bool(jnp.all(proposals[:, 0] == 0)), "Single batch only."

    layer = ProposalTargetLayerPallas(num_classes=num_classes, bg_pid_label=-2)
    run = jax.jit(lambda p, g: layer(p, g))
    outs = run(proposals, gt_boxes)
    outs = jax.block_until_ready(outs)

    props_k, cls_k, pid_k, deltas, iw, ow = outs
    N = CFG["BATCH_SIZE"]
    assert props_k.shape == (N, 5)
    assert cls_k.shape == (N,) and cls_k.dtype == jnp.int32
    assert pid_k.shape == (N,) and pid_k.dtype == jnp.int32
    assert deltas.shape == (N, 4 * num_classes)
    assert iw.shape == (N, 4 * num_classes) and ow.shape == (N, 4 * num_classes)
    assert bool(jnp.all(jnp.isfinite(deltas)))
    print("KERNEL_OK")
</pallas_src>

<mosaic_0001>
module attributes {stable_mosaic.version = 11 : i64} {
  func.func @_match_kernel(%arg0: i32, %arg1: memref<4x128xf32, #tpu.memory_space<vmem>>, %arg2: memref<8x8xf32, #tpu.memory_space<vmem>>, %arg3: memref<8x8xf32, #tpu.memory_space<vmem>>, %arg4: memref<8x128xf32, #tpu.memory_space<vmem>>) attributes {dimension_semantics = [#tpu.dimension_semantics<parallel>], iteration_bounds = array<i64: 1>, scalar_prefetch = 0 : i64, scratch_operands = 0 : i64, tpu.core_type = #tpu.core_type<tc>, window_params = [{transform_indices = @transform_0, window_bounds = array<i64: 4, 128>}, {pipeline_mode = #tpu.pipeline_mode<synchronous>, transform_indices = @transform_1, window_bounds = array<i64: 8, 8>}, {pipeline_mode = #tpu.pipeline_mode<synchronous>, transform_indices = @transform_2, window_bounds = array<i64: 8, 8>}, {transform_indices = @transform_3, window_bounds = array<i64: 8, 128>}]} {
    %c0 = arith.constant 0 : index
    %c0_0 = arith.constant 0 : index
    %0 = vector.load %arg1[%c0, %c0_0] : memref<4x128xf32, #tpu.memory_space<vmem>>, vector<1x128xf32>
    %c1 = arith.constant 1 : index
    %c0_1 = arith.constant 0 : index
    %1 = vector.load %arg1[%c1, %c0_1] : memref<4x128xf32, #tpu.memory_space<vmem>>, vector<1x128xf32>
    %c2 = arith.constant 2 : index
    %c0_2 = arith.constant 0 : index
    %2 = vector.load %arg1[%c2, %c0_2] : memref<4x128xf32, #tpu.memory_space<vmem>>, vector<1x128xf32>
    %c3 = arith.constant 3 : index
    %c0_3 = arith.constant 0 : index
    %3 = vector.load %arg1[%c3, %c0_3] : memref<4x128xf32, #tpu.memory_space<vmem>>, vector<1x128xf32>
    %c0_4 = arith.constant 0 : index
    %c0_5 = arith.constant 0 : index
    %4 = vector.load %arg2[%c0_4, %c0_5] : memref<8x8xf32, #tpu.memory_space<vmem>>, vector<8x1xf32>
    %c0_6 = arith.constant 0 : index
    %c1_7 = arith.constant 1 : index
    %5 = vector.load %arg2[%c0_6, %c1_7] : memref<8x8xf32, #tpu.memory_space<vmem>>, vector<8x1xf32>
    %c0_8 = arith.constant 0 : index
    %c2_9 = arith.constant 2 : index
    %6 = vector.load %arg2[%c0_8, %c2_9] : memref<8x8xf32, #tpu.memory_space<vmem>>, vector<8x1xf32>
    %c0_10 = arith.constant 0 : index
    %c3_11 = arith.constant 3 : index
    %7 = vector.load %arg2[%c0_10, %c3_11] : memref<8x8xf32, #tpu.memory_space<vmem>>, vector<8x1xf32>
    %8 = arith.subf %2, %0 : vector<1x128xf32>
    %cst = arith.constant 1.000000e+00 : f32
    %9 = vector.broadcast %cst : f32 to vector<1x128xf32>
    %10 = arith.addf %8, %9 : vector<1x128xf32>
    %11 = arith.subf %3, %1 : vector<1x128xf32>
    %cst_12 = arith.constant 1.000000e+00 : f32
    %12 = vector.broadcast %cst_12 : f32 to vector<1x128xf32>
    %13 = arith.addf %11, %12 : vector<1x128xf32>
    %14 = arith.mulf %10, %13 : vector<1x128xf32>
    %15 = arith.subf %6, %4 : vector<8x1xf32>
    %cst_13 = arith.constant 1.000000e+00 : f32
    %16 = vector.broadcast %cst_13 : f32 to vector<8x1xf32>
    %17 = arith.addf %15, %16 : vector<8x1xf32>
    %18 = arith.subf %7, %5 : vector<8x1xf32>
    %cst_14 = arith.constant 1.000000e+00 : f32
    %19 = vector.broadcast %cst_14 : f32 to vector<8x1xf32>
    %20 = arith.addf %18, %19 : vector<8x1xf32>
    %21 = arith.mulf %17, %20 : vector<8x1xf32>
    %22 = vector.broadcast %2 : vector<1x128xf32> to vector<8x128xf32>
    %23 = vector.broadcast %6 : vector<8x1xf32> to vector<8x128xf32>
    %24 = arith.minimumf %22, %23 : vector<8x128xf32>
    %25 = vector.broadcast %0 : vector<1x128xf32> to vector<8x128xf32>
    %26 = vector.broadcast %4 : vector<8x1xf32> to vector<8x128xf32>
    %27 = arith.maximumf %25, %26 : vector<8x128xf32>
    %28 = arith.subf %24, %27 : vector<8x128xf32>
    %cst_15 = arith.constant 1.000000e+00 : f32
    %29 = vector.broadcast %cst_15 : f32 to vector<8x128xf32>
    %30 = arith.addf %28, %29 : vector<8x128xf32>
    %cst_16 = arith.constant 0.000000e+00 : f32
    %31 = vector.broadcast %cst_16 : f32 to vector<8x128xf32>
    %32 = arith.maximumf %30, %31 : vector<8x128xf32>
    %33 = vector.broadcast %3 : vector<1x128xf32> to vector<8x128xf32>
    %34 = vector.broadcast %7 : vector<8x1xf32> to vector<8x128xf32>
    %35 = arith.minimumf %33, %34 : vector<8x128xf32>
    %36 = vector.broadcast %1 : vector<1x128xf32> to vector<8x128xf32>
    %37 = vector.broadcast %5 : vector<8x1xf32> to vector<8x128xf32>
    %38 = arith.maximumf %36, %37 : vector<8x128xf32>
    %39 = arith.subf %35, %38 : vector<8x128xf32>
    %cst_17 = arith.constant 1.000000e+00 : f32
    %40 = vector.broadcast %cst_17 : f32 to vector<8x128xf32>
    %41 = arith.addf %39, %40 : vector<8x128xf32>
    %cst_18 = arith.constant 0.000000e+00 : f32
    %42 = vector.broadcast %cst_18 : f32 to vector<8x128xf32>
    %43 = arith.maximumf %41, %42 : vector<8x128xf32>
    %44 = arith.mulf %32, %43 : vector<8x128xf32>
    %45 = vector.broadcast %14 : vector<1x128xf32> to vector<8x128xf32>
    %46 = vector.broadcast %21 : vector<8x1xf32> to vector<8x128xf32>
    %47 = arith.addf %45, %46 : vector<8x128xf32>
    %48 = arith.subf %47, %44 : vector<8x128xf32>
    %cst_19 = arith.constant 9.99999993E-9 : f32
    %49 = vector.broadcast %cst_19 : f32 to vector<8x128xf32>
    %50 = arith.maximumf %48, %49 : vector<8x128xf32>
    %51 = tpu.reciprocal %50 : vector<8x128xf32> -> vector<8x128xf32>
    %52 = arith.mulf %44, %51 : vector<8x128xf32>
    %cst_20 = arith.constant dense<0xFF800000> : vector<128xf32>
    %53 = vector.multi_reduction <maximumf>, %52, %cst_20 [0] : vector<8x128xf32> to vector<128xf32>
    %54 = vector.shape_cast %53 : vector<128xf32> to vector<1x128xf32>
    %55 = tpu.iota {dimensions = array<i32: 0>} : vector<8x128xi32>
    %56 = vector.broadcast %54 : vector<1x128xf32> to vector<8x128xf32>
    %57 = arith.cmpf oge, %52, %56 : vector<8x128xf32>
    %c8_i32 = arith.constant 8 : i32
    %58 = vector.broadcast %c8_i32 : i32 to vector<8x128xi32>
    %59 = arith.select %57, %55, %58 : vector<8x128xi1>, vector<8x128xi32>
    %cst_21 = arith.constant dense<2147483647> : vector<128xi32>
    %60 = vector.multi_reduction <minsi>, %59, %cst_21 [0] : vector<8x128xi32> to vector<128xi32>
    %61 = vector.shape_cast %60 : vector<128xi32> to vector<1x128xi32>
    %62 = vector.broadcast %61 : vector<1x128xi32> to vector<8x128xi32>
    %63 = arith.cmpi eq, %55, %62 : vector<8x128xi32>
    %64 = arith.extui %63 : vector<8x128xi1> to vector<8x128xi32>
    %65 = arith.sitofp %64 : vector<8x128xi32> to vector<8x128xf32>
    %c0_22 = arith.constant 0 : index
    %c0_23 = arith.constant 0 : index
    %66 = vector.load %arg3[%c0_22, %c0_23] : memref<8x8xf32, #tpu.memory_space<vmem>>, vector<8x8xf32>
    %cst_24 = arith.constant dense<0.000000e+00> : vector<8x128xf32>
    %67 = tpu.matmul %66, %65, %cst_24 {dimension_numbers = #tpu.dot_dimension_numbers<[1], [0], [0], [1], [0, 0, 1, 1], [], []>} : vector<8x8xf32>, vector<8x128xf32>, vector<8x128xf32> -> vector<8x128xf32>
    %68 = vector.extract_strided_slice %67 {offsets = [0, 0], sizes = [1, 128], strides = [1, 1]} : vector<8x128xf32> to vector<1x128xf32>
    %69 = vector.extract_strided_slice %67 {offsets = [1, 0], sizes = [1, 128], strides = [1, 1]} : vector<8x128xf32> to vector<1x128xf32>
    %70 = vector.extract_strided_slice %67 {offsets = [2, 0], sizes = [1, 128], strides = [1, 1]} : vector<8x128xf32> to vector<1x128xf32>
    %71 = vector.extract_strided_slice %67 {offsets = [3, 0], sizes = [1, 128], strides = [1, 1]} : vector<8x128xf32> to vector<1x128xf32>
    %72 = vector.extract_strided_slice %67 {offsets = [4, 0], sizes = [1, 128], strides = [1, 1]} : vector<8x128xf32> to vector<1x128xf32>
    %73 = vector.extract_strided_slice %67 {offsets = [5, 0], sizes = [1, 128], strides = [1, 1]} : vector<8x128xf32> to vector<1x128xf32>
    %74 = arith.subf %2, %0 : vector<1x128xf32>
    %cst_25 = arith.constant 1.000000e+00 : f32
    %75 = vector.broadcast %cst_25 : f32 to vector<1x128xf32>
    %76 = arith.addf %74, %75 : vector<1x128xf32>
    %77 = arith.subf %3, %1 : vector<1x128xf32>
    %cst_26 = arith.constant 1.000000e+00 : f32
    %78 = vector.broadcast %cst_26 : f32 to vector<1x128xf32>
    %79 = arith.addf %77, %78 : vector<1x128xf32>
    %80 = tpu.reciprocal %76 : vector<1x128xf32> -> vector<1x128xf32>
    %81 = tpu.reciprocal %79 : vector<1x128xf32> -> vector<1x128xf32>
    %cst_27 = arith.constant 5.000000e-01 : f32
    %82 = vector.broadcast %cst_27 : f32 to vector<1x128xf32>
    %83 = arith.mulf %82, %76 : vector<1x128xf32>
    %84 = arith.addf %0, %83 : vector<1x128xf32>
    %cst_28 = arith.constant 5.000000e-01 : f32
    %85 = vector.broadcast %cst_28 : f32 to vector<1x128xf32>
    %86 = arith.mulf %85, %79 : vector<1x128xf32>
    %87 = arith.addf %1, %86 : vector<1x128xf32>
    %88 = arith.subf %70, %68 : vector<1x128xf32>
    %cst_29 = arith.constant 1.000000e+00 : f32
    %89 = vector.broadcast %cst_29 : f32 to vector<1x128xf32>
    %90 = arith.addf %88, %89 : vector<1x128xf32>
    %91 = arith.subf %71, %69 : vector<1x128xf32>
    %cst_30 = arith.constant 1.000000e+00 : f32
    %92 = vector.broadcast %cst_30 : f32 to vector<1x128xf32>
    %93 = arith.addf %91, %92 : vector<1x128xf32>
    %cst_31 = arith.constant 5.000000e-01 : f32
    %94 = vector.broadcast %cst_31 : f32 to vector<1x128xf32>
    %95 = arith.mulf %94, %90 : vector<1x128xf32>
    %96 = arith.addf %68, %95 : vector<1x128xf32>
    %cst_32 = arith.constant 5.000000e-01 : f32
    %97 = vector.broadcast %cst_32 : f32 to vector<1x128xf32>
    %98 = arith.mulf %97, %93 : vector<1x128xf32>
    %99 = arith.addf %69, %98 : vector<1x128xf32>
    %100 = arith.subf %96, %84 : vector<1x128xf32>
    %101 = arith.mulf %100, %80 : vector<1x128xf32>
    %cst_33 = arith.constant 0.000000e+00 : f32
    %102 = vector.broadcast %cst_33 : f32 to vector<1x128xf32>
    %103 = arith.subf %101, %102 : vector<1x128xf32>
    %cst_34 = arith.constant 1.000000e+01 : f32
    %104 = vector.broadcast %cst_34 : f32 to vector<1x128xf32>
    %105 = arith.mulf %103, %104 : vector<1x128xf32>
    %106 = arith.subf %99, %87 : vector<1x128xf32>
    %107 = arith.mulf %106, %81 : vector<1x128xf32>
    %cst_35 = arith.constant 0.000000e+00 : f32
    %108 = vector.broadcast %cst_35 : f32 to vector<1x128xf32>
    %109 = arith.subf %107, %108 : vector<1x128xf32>
    %cst_36 = arith.constant 1.000000e+01 : f32
    %110 = vector.broadcast %cst_36 : f32 to vector<1x128xf32>
    %111 = arith.mulf %109, %110 : vector<1x128xf32>
    %112 = arith.mulf %90, %80 : vector<1x128xf32>
    %113 = math.log %112 : vector<1x128xf32>
    %cst_37 = arith.constant 0.000000e+00 : f32
    %114 = vector.broadcast %cst_37 : f32 to vector<1x128xf32>
    %115 = arith.subf %113, %114 : vector<1x128xf32>
    %cst_38 = arith.constant 5.000000e+00 : f32
    %116 = vector.broadcast %cst_38 : f32 to vector<1x128xf32>
    %117 = arith.mulf %115, %116 : vector<1x128xf32>
    %118 = arith.mulf %93, %81 : vector<1x128xf32>
    %119 = math.log %118 : vector<1x128xf32>
    %cst_39 = arith.constant 0.000000e+00 : f32
    %120 = vector.broadcast %cst_39 : f32 to vector<1x128xf32>
    %121 = arith.subf %119, %120 : vector<1x128xf32>
    %cst_40 = arith.constant 5.000000e+00 : f32
    %122 = vector.broadcast %cst_40 : f32 to vector<1x128xf32>
    %123 = arith.mulf %121, %122 : vector<1x128xf32>
    %cst_41 = arith.constant 0.000000e+00 : f32
    %124 = vector.broadcast %cst_41 : f32 to vector<1x128xf32>
    %125 = tpu.concatenate %54, %72, %73, %105, %111, %117, %123, %124 in 0 : vector<1x128xf32>, vector<1x128xf32>, vector<1x128xf32>, vector<1x128xf32>, vector<1x128xf32>, vector<1x128xf32>, vector<1x128xf32>, vector<1x128xf32> -> vector<8x128xf32>
    %c0_42 = arith.constant 0 : index
    %c0_43 = arith.constant 0 : index
    %126 = vector.load %arg4[%c0_42, %c0_43] : memref<8x128xf32, #tpu.memory_space<vmem>>, vector<8x128xf32>
    tpu.vector_store %arg4[%c0_42, %c0_43], %125 {strides = array<i32>} : memref<8x128xf32, #tpu.memory_space<vmem>>, vector<8x128xf32>,
    return
  }
  func.func @transform_0(%arg0: i32) -> (i32, i32) {
    %c0_i32 = arith.constant 0 : i32
    %c0_i32_0 = arith.constant 0 : i32
    return %c0_i32, %arg0 : i32, i32
  }
  func.func @transform_1(%arg0: i32) -> (i32, i32) {
    %c0_i32 = arith.constant 0 : i32
    %c0_i32_0 = arith.constant 0 : i32
    %c0_i32_1 = arith.constant 0 : i32
    return %c0_i32, %c0_i32_0 : i32, i32
  }
  func.func @transform_2(%arg0: i32) -> (i32, i32) {
    %c0_i32 = arith.constant 0 : i32
    %c0_i32_0 = arith.constant 0 : i32
    %c0_i32_1 = arith.constant 0 : i32
    return %c0_i32, %c0_i32_0 : i32, i32
  }
  func.func @transform_3(%arg0: i32) -> (i32, i32) {
    %c0_i32 = arith.constant 0 : i32
    %c0_i32_0 = arith.constant 0 : i32
    return %c0_i32, %arg0 : i32, i32
  }
}

</mosaic_0001>

<llo_original>
// kernel: _lambda_.1
$region0: #{_lambda_.1}
  #allocation0 [shape = 'u32[]', space=smem, size = 0x4, offset = 0x4, fixed_abs, tag = 'smem constant byte address 0x4 - core index']
  #allocation1 [shape = 'u32[144,128]{1,0:T(1,128)}', space=vmem, size = 0x12000, scoped, tag = 'internal scratch']
  %s0 = inlined_call_operand.vmem [shape: f32[4,128], index: 0, kind: input, shape index: {}]
  %s1 = inlined_call_operand.vmem [shape: f32[8,8], index: 1, kind: input, shape index: {}]
  %s2 = inlined_call_operand.vmem [shape: f32[8,8], index: 2, kind: input, shape index: {}]
  %s3 = inlined_call_operand.vmem [shape: f32[8,128], index: 3, kind: output, shape index: {}]
  %s4 = sld [smem:[#allocation0]]
  $region22: #{_lambda_.1} parent=0
    _
  %s6 = ssub.s32 1, %s4
  %s7 = scalar_select 0, %s6, %s4
  // Predicated region
  $region2: #{_lambda_.1} parent=0 // pred_check
    _
  $region3: #{_lambda_.1} parent=0 // pred_check_branch
    %9 = sbr.rel (0) target = $region5
  $region4: #{_lambda_.1} parent=0 // pred_region
    _
  $region5: #{_lambda_.1} parent=0 // pred_fallthru
    _
  // Predicated region
  $region6: #{_lambda_.1} parent=0 // pred_check
    _
  $region7: #{_lambda_.1} parent=0 // pred_check_branch
    %11 = sbr.rel (0) target = $region9
  $region8: #{_lambda_.1} parent=0 // pred_region
    _
  $region9: #{_lambda_.1} parent=0 // pred_fallthru
    _
  // Predicated region
  $region10: #{_lambda_.1} parent=0 // pred_check
    _
  $region11: #{_lambda_.1} parent=0 // pred_check_branch
    %13 = sbr.rel (0) target = $region13
  $region12: #{_lambda_.1} parent=0 // pred_region
    _
  $region13: #{_lambda_.1} parent=0 // pred_fallthru
    _
  %v14 = vld [vmem:[%s0] sm:$0x1]
  %v15 = vld [vmem:[%s0 + $0x1] sm:$0x1]
  %v16 = vld [vmem:[%s0 + $0x2] sm:$0x1]
  %v17 = vld [vmem:[%s0 + $0x3] sm:$0x1]
  %v18 = vld [vmem:[%s1] sm:$0xff]
  %v19 = vsub.f32 %v16, %v14
  %v20 = vadd.f32 %v19, 1.0
  %v21 = vsub.f32 %v17, %v15
  %v22 = vadd.f32 %v21, 1.0
  %v23 = vmul.f32 %v20, %v22
  %25 = vrot.lane.b32.xlu0 %v18, 2
  %v26 = vpop.permute.xlu0 %25
  %v28 = vsub.f32 %v18, %v26
  %v29 = vadd.f32 %v28, 1.0
  %31 = vrot.lane.b32.xlu0 %v29, 127
  %v32 = vpop.permute.xlu0 %31
  %v34 = vmul.f32 %v29, %v32
  %v35 = vlaneseq
  %v36 = vshrl.u32 %v35, 7
  %v37 = vsub.s32 0, %v36
  %v38 = vrot.slane %v16, %v37
  %39 = vset.pattern.permute.xlu0 2
  %40 = vperm.xlu0 %39, %v18
  %v41 = vpop.permute.xlu0 %40
  %v43 = vmin.f32 %v38, %v41
  %v44 = vlaneseq
  %v45 = vshrl.u32 %v44, 7
  %v46 = vsub.s32 0, %v45
  %v47 = vrot.slane %v14, %v46
  %48 = vset.pattern.permute.xlu0 0
  %49 = vperm.xlu0 %48, %v18
  %v50 = vpop.permute.xlu0 %49
  %v52 = vmax.f32 %v47, %v50
  %v53 = vsub.f32 %v43, %v52
  %v54 = vadd.f32 %v53, 1.0
  %v55 = vmax.f32 %v54, 0.0
  %v56 = vlaneseq
  %v57 = vshrl.u32 %v56, 7
  %v58 = vsub.s32 0, %v57
  %v59 = vrot.slane %v17, %v58
  %60 = vset.pattern.permute.xlu0 3
  %61 = vperm.xlu0 %60, %v18
  %v62 = vpop.permute.xlu0 %61
  %v64 = vmin.f32 %v59, %v62
  %v65 = vlaneseq
  %v66 = vshrl.u32 %v65, 7
  %v67 = vsub.s32 0, %v66
  %v68 = vrot.slane %v15, %v67
  %69 = vset.pattern.permute.xlu0 1
  %70 = vperm.xlu0 %69, %v18
  %v71 = vpop.permute.xlu0 %70
  %v73 = vmax.f32 %v68, %v71
  %v74 = vsub.f32 %v64, %v73
  %v75 = vadd.f32 %v74, 1.0
  %v76 = vmax.f32 %v75, 0.0
  %v77 = vmul.f32 %v55, %v76
  %v78 = vlaneseq
  %v79 = vshrl.u32 %v78, 7
  %v80 = vsub.s32 0, %v79
  %v81 = vrot.slane %v23, %v80
  %83 = vset.pattern.permute.xlu0 2
  %84 = vperm.xlu0 %83, %v34
  %v85 = vpop.permute.xlu0 %84
  %v87 = vadd.f32 %v81, %v85
  %v88 = vsub.f32 %v87, %v77
  %v89 = vmax.f32 %v88, 1e-08
  %v90 = vrcp.pop %v89
  %v91 = vmul.f32 %v77, %v90
  %v92 = vrot.slane %v91, 4
  %v93 = vmax.f32 %v91, %v92
  %v94 = vrot.slane %v93, 2
  %v95 = vmax.f32 %v93, %v94
  %v96 = vrot.slane %v95, 1
  %v97 = vmax.f32 %v95, %v96
  %v98 = vlaneseq
  %v99 = vshrl.u32 %v98, 7
  %vm100 = vcmp.ge.f32.partialorder %v91, %v97
  %v101 = vsel %vm100, %v99, 8
  %v102 = vrot.slane %v101, 4
  %vm103 = vcmp.lt.s32.totalorder %v101, %v102
  %v104 = vsel %vm103, %v101, %v102
  %v105 = vrot.slane %v104, 2
  %vm106 = vcmp.lt.s32.totalorder %v104, %v105
  %v107 = vsel %vm106, %v104, %v105
  %v108 = vrot.slane %v107, 1
  %vm109 = vcmp.lt.s32.totalorder %v107, %v108
  %v110 = vsel %vm109, %v107, %v108
  %vm111 = vcmp.eq.s32.totalorder %v99, %v110
  %v112 = vsel %vm111, 1, 0
  %v113 = vcvt.s32.f32 %v112
  %v114 = vld [vmem:[%s2] sm:$0xff]
  %vm115 = vcmask 64512
  %v117 = vsel %vm115, %v114, 0
  %119 = vmatprep.subr.mxu0 0.0
  %120 = vmatpush1.msra.mxu0 %v113
  %121 = vmatprep.subr.mxu0 0.0
  %122 = vmatpush1.msra.mxu0 0.0
  %123 = vmatprep.subr.mxu0 0.0
  %124 = vmatpush1.msra.mxu0 0.0
  %125 = vmatprep.subr.mxu0 0.0
  %126 = vmatpush1.msra.mxu0 0.0
  %127 = vmatprep.subr.mxu0 0.0
  %128 = vmatpush1.msra.mxu0 0.0
  %129 = vmatprep.subr.mxu0 0.0
  %130 = vmatpush1.msra.mxu0 0.0
  %131 = vmatprep.subr.mxu0 0.0
  %132 = vmatpush1.msra.mxu0 0.0
  %133 = vmatprep.subr.mxu0 0.0
  %134 = vmatpush1.msra.mxu0 0.0
  %135 = vmatprep.subr.mxu0 0.0
  %136 = vmatpush1.msra.mxu0 0.0
  %137 = vmatprep.subr.mxu0 0.0
  %138 = vmatpush1.msra.mxu0 0.0
  %139 = vmatprep.subr.mxu0 0.0
  %140 = vmatpush1.msra.mxu0 0.0
  %141 = vmatprep.subr.mxu0 0.0
  %142 = vmatpush1.msra.mxu0 0.0
  %143 = vmatprep.subr.mxu0 0.0
  %144 = vmatpush1.msra.mxu0 0.0
  %145 = vmatprep.subr.mxu0 0.0
  %146 = vmatpush1.msra.mxu0 0.0
  %147 = vmatprep.subr.mxu0 0.0
  %148 = vmatpush1.msra.mxu0 0.0
  %149 = vmatprep.subr.mxu0 0.0
  %150 = vmatpush1.msra.mxu0 0.0
  %151 = vmatprep.subr.mxu0 0.0
  %152 = vmatpush1.msra.mxu0 0.0
  %153 = vmatprep.subr.mxu0 0.0
  %154 = vmatpush1.msra.mxu0 0.0
  %155 = vmatprep.subr.mxu0 0.0
  %156 = vmatpush1.msra.mxu0 0.0
  %157 = vmatprep.subr.mxu0 0.0
  %158 = vmatpush1.msra.mxu0 0.0
  %159 = vmatprep.subr.mxu0 0.0
  %160 = vmatpush1.msra.mxu0 0.0
  %161 = vmatprep.subr.mxu0 0.0
  %162 = vmatpush1.msra.mxu0 0.0
  %163 = vmatprep.subr.mxu0 0.0
  %164 = vmatpush1.msra.mxu0 0.0
  %165 = vmatprep.subr.mxu0 0.0
  %166 = vmatpush1.msra.mxu0 0.0
  %167 = vmatprep.subr.mxu0 0.0
  %168 = vmatpush1.msra.mxu0 0.0
  %169 = vmatprep.subr.mxu0 0.0
  %170 = vmatpush1.msra.mxu0 0.0
  %171 = vmatprep.subr.mxu0 0.0
  %172 = vmatpush1.msra.mxu0 0.0
  %173 = vmatprep.subr.mxu0 0.0
  %174 = vmatpush1.msra.mxu0 0.0
  %175 = vmatprep.subr.mxu0 0.0
  %176 = vmatpush1.msra.mxu0 0.0
  %177 = vmatprep.subr.mxu0 0.0
  %178 = vmatpush1.msra.mxu0 0.0
  %179 = vmatprep.subr.mxu0 0.0
  %180 = vmatpush1.msra.mxu0 0.0
  %181 = vmatprep.subr.mxu0 0.0
  %182 = vmatpush1.msra.mxu0 0.0
  %183 = vmatprep.mubr.f32.mxu0 0.0
  %184 = vmatmul.mubr.f32.gmra.mrb[0].mxu0 %v117
  %v185 = vpop.f32.mrb[0].mxu0
  %v186 = vadd.f32 0.0, %v185
  %v187 = vpop.f32.mrb[0].mxu0
  %188 = vdwg.mxu0
  %v189 = vrcp.pop %v20
  %v190 = vrcp.pop %v22
  %v191 = vmul.f32 %v20, 0.5
  %v192 = vadd.f32 %v14, %v191
  %v193 = vmul.f32 %v22, 0.5
  %v194 = vadd.f32 %v15, %v193
  %v196 = vrot.slane %v186, 6
  %v198 = vsub.f32 %v186, %v196
  %v199 = vadd.f32 %v198, 1.0
  %v200 = vmul.f32 %v199, 0.5
  %v202 = vrot.slane %v200, 2
  %v204 = vadd.f32 %v186, %v202
  %v205 = vsub.f32 %v204, %v192
  %v206 = vmul.f32 %v205, %v189
  %v207 = vmul.f32 %v206, 10.0
  %v209 = vrot.slane %v194, 7
  %v211 = vsub.f32 %v204, %v209
  %v213 = vrot.slane %v190, 7
  %v215 = vmul.f32 %v211, %v213
  %v216 = vmul.f32 %v215, 10.0
  %v218 = vrot.slane %v189, 6
  %v220 = vmul.f32 %v199, %v218
  %v221 = vlog2.pop %v220
  %v222 = vmul.f32 %v221, 0.6931472
  %v223 = vmul.f32 %v222, 5.0
  %v224 = vrot.slane %v190, 5
  %v226 = vmul.f32 %v199, %v224
  %v227 = vlog2.pop %v226
  %v228 = vmul.f32 %v227, 0.6931472
  %v229 = vmul.f32 %v228, 5.0
  %v230 = vrot.slane %v186, 3
  %v233 = vrot.slane %v207, 5
  %v236 = vrot.slane %v216, 5
  %v239 = vrot.slane %v223, 5
  %v242 = vrot.slane %v229, 5
  %vm244 = vcmask 1040384
  %v245 = vsel %vm244, %v97, %v230
  %vm246 = vcmask 1041408
  %v247 = vsel %vm246, %v245, %v230
  %vm248 = vcmask 1042432
  %v249 = vsel %vm248, %v247, %v233
  %vm250 = vcmask 1043456
  %v251 = vsel %vm250, %v249, %v236
  %vm252 = vcmask 1044480
  %v253 = vsel %vm252, %v251, %v239
  %vm254 = vcmask 1045504
  %v255 = vsel %vm254, %v253, %v242
  %vm256 = vcmask 1046528
  %v257 = vsel %vm256, %v255, 0.0
  %258 = vst [vmem:[%s3] sm:$0xff] %v257
  // Predicated region
  $region14: #{_lambda_.1} parent=0 // pred_check
    _
  $region15: #{_lambda_.1} parent=0 // pred_check_branch
    %260 = sbr.rel (0) target = $region17
  $region16: #{_lambda_.1} parent=0 // pred_region
    _
  $region17: #{_lambda_.1} parent=0 // pred_fallthru
    _
  // Predicated region
  $region18: #{_lambda_.1} parent=0 // pred_check
    _
  $region19: #{_lambda_.1} parent=0 // pred_check_branch
    %262 = sbr.rel (0) target = $region21
  $region20: #{_lambda_.1} parent=0 // pred_region
    _
  $region21: #{_lambda_.1} parent=0 // pred_fallthru
    _

</llo_original>
